<compile_context>
chip_gen: v5e
topology: v5e:2x2
jax: 0.10.0
libtpu: 0.0.40
codegen_flags: <defaults>
</compile_context>

<pallas_src>
import math
import jax
import jax.numpy as jnp
from jax import lax
from jax.experimental import pallas as pl
from jax.experimental.pallas import tpu as pltpu


def _round_up(x, m):
    return (x + m - 1) // m * m


# ----------------------------------------------------------------------------
# Kernel: one grid step == Tb GRU time steps.  W_hh resident, h in scratch.
# ----------------------------------------------------------------------------
def gru_seq_kernel(gi_ref, h0_ref, whh_ref, bhh_ref, out_ref, h_scratch):
    """gi_ref : (Tb, Bp, 3*Hp)  precomputed x@W_ih^T + b_ih for these steps
    h0_ref : (Bp, Hp)        initial hidden state (resident)
    whh_ref: (Hp, 3*Hp)      packed W_hh^T, per-gate 128-aligned slabs (resident)
    bhh_ref: (1, 3*Hp)       b_hh (resident)
    out_ref: (Tb, Bp, Hp)    per-step hidden states
    h_scratch: (Bp, Hp) f32  hidden state carried across grid steps
    """
    Hp = h0_ref.shape[1]
    Tb = gi_ref.shape[0]
    tb = pl.program_id(0)

    @pl.when(tb == 0)
    def _():
        h_scratch[...] = h0_ref[...].astype(jnp.float32)

    # Hoist the resident loads out of the unrolled loop.
    whh = whh_ref[...]
    bhh = bhh_ref[...]

    def step(s, h):
        gi = gi_ref[s].astype(jnp.float32)          # (Bp, 3Hp); b_ih already folded in
        gh = jnp.dot(h.astype(whh.dtype), whh,
                     preferred_element_type=jnp.float32) + bhh
        # Gate slabs are 128-aligned (Hp multiple of 128) -> tile-aligned slices.
        r = jax.nn.sigmoid(gi[:, 0:Hp] + gh[:, 0:Hp])
        z = jax.nn.sigmoid(gi[:, Hp:2 * Hp] + gh[:, Hp:2 * Hp])
        n = jnp.tanh(gi[:, 2 * Hp:3 * Hp] + r * gh[:, 2 * Hp:3 * Hp])
        h_new = n + z * (h - n)                     # == (1 - z) * n + z * h
        out_ref[s] = h_new.astype(out_ref.dtype)
        return h_new

    h_final = lax.fori_loop(0, Tb, step, h_scratch[...], unroll=True)
    h_scratch[...] = h_final


# ----------------------------------------------------------------------------
# One-time parameter packing (call once at setup time and cache the result).
# ----------------------------------------------------------------------------
def prepare_gru_params(weight_ih, weight_hh, bias_ih, bias_hh, dtype=None):
    """Transpose + pad PyTorch-layout GRU weights into MXU/lane-friendly slabs.

    weight_ih : (3H, I), weight_hh : (3H, H), biases : (3H,)
    Returns dict with:
      wih_t : (Ip, 3*Hp)   whh_t : (Hp, 3*Hp)   bih, bhh : (1, 3*Hp) fp32
    Hp, Ip padded to multiples of 128; each gate occupies its own Hp-wide,
    128-aligned column slab.  `dtype` (e.g. jnp.bfloat16 on v6e/v7x) controls
    the stored weight precision; matmul accumulation stays fp32.
    """
    H = weight_hh.shape[1]
    I = weight_ih.shape[1]
    Hp = _round_up(H, 128)
    Ip = _round_up(I, 128)
    dtype = dtype or weight_ih.dtype

    def pack_w(w, K, Kp):
        wt = jnp.zeros((Kp, 3 * Hp), dtype)
        for g in range(3):
            blk = jnp.transpose(w[g * H:(g + 1) * H, :]).astype(dtype)  # (K, H)
            wt = wt.at[:K, g * Hp:g * Hp + H].set(blk)
        return wt

    def pack_b(b):
        bb = jnp.zeros((1, 3 * Hp), jnp.float32)
        for g in range(3):
            bb = bb.at[0, g * Hp:g * Hp + H].set(
                b[g * H:(g + 1) * H].astype(jnp.float32))
        return bb

    return dict(
        wih_t=pack_w(weight_ih, I, Ip),
        whh_t=pack_w(weight_hh, H, Hp),
        bih=pack_b(bias_ih),
        bhh=pack_b(bias_hh),
        H=H, I=I, Hp=Hp, Ip=Ip,
    )


# ----------------------------------------------------------------------------
# Fused multi-step recurrence: hoisted GI matmul + one pallas_call over T.
# ----------------------------------------------------------------------------
def gru_sequence(x_seq, h0, params, *, tb=8):
    """x_seq: (T, B, I), h0: (B, H) -> (T, B, H) hidden states for all steps."""
    T, B, I = x_seq.shape
    H = h0.shape[1]
    Hp, Ip = params["Hp"], params["Ip"]
    Bp = _round_up(B, 8)
    Tb = max(1, min(tb, T))
    Tp = _round_up(T, Tb)
    n_blocks = Tp // Tb

    w_dtype = params["wih_t"].dtype

    # ---- Hoisted, time-invariant input projection: one MXU-filling matmul ----
    # Padded time steps (t >= T) see GI = b_ih only; their outputs are sliced off.
    x_p = jnp.zeros((Tp, Bp, Ip), w_dtype).at[:T, :B, :I].set(x_seq.astype(w_dtype))
    gi = jnp.dot(x_p.reshape(Tp * Bp, Ip), params["wih_t"],
                 preferred_element_type=jnp.float32) + params["bih"]
    gi = gi.reshape(Tp, Bp, 3 * Hp)                       # fp32, b_ih folded in

    h0_p = jnp.zeros((Bp, Hp), jnp.float32).at[:B, :H].set(h0.astype(jnp.float32))

    out = pl.pallas_call(
        gru_seq_kernel,
        out_shape=jax.ShapeDtypeStruct((Tp, Bp, Hp), x_seq.dtype),
        grid_spec=pltpu.PrefetchScalarGridSpec(
            num_scalar_prefetch=0,
            grid=(n_blocks,),
            in_specs=[
                pl.BlockSpec((Tb, Bp, 3 * Hp), lambda t: (t, 0, 0)),  # GI streamed
                pl.BlockSpec((Bp, Hp), lambda t: (0, 0)),             # h0 resident
                pl.BlockSpec((Hp, 3 * Hp), lambda t: (0, 0)),         # W_hh^T resident
                pl.BlockSpec((1, 3 * Hp), lambda t: (0, 0)),          # b_hh resident
            ],
            out_specs=pl.BlockSpec((Tb, Bp, Hp), lambda t: (t, 0, 0)),
            scratch_shapes=[pltpu.VMEM((Bp, Hp), jnp.float32)],       # carried h
        ),
        compiler_params=pltpu.CompilerParams(
            dimension_semantics=("arbitrary",),   # recurrent axis: strictly sequential
        ),
    )(gi, h0_p, params["whh_t"], params["bhh"])

    return out[:T, :B, :H]


# ----------------------------------------------------------------------------
# Single-step GRUCell.forward (original module semantics) == T=1 of the above.
# Takes pre-packed params so the packing stays out of the hot path.
# ----------------------------------------------------------------------------
def gru_cell(x, hx, params):
    """x: (B, I), hx: (B, H), params = prepare_gru_params(...) -> (B, H)."""
    return gru_sequence(x[None], hx, params, tb=1)[0]


# ----------------------------------------------------------------------------
# Pure-JAX reference mirroring torch._VF.gru_cell.
# ----------------------------------------------------------------------------
def gru_cell_ref(x, hx, weight_ih, weight_hh, bias_ih, bias_hh):
    H = hx.shape[1]
    gi = x @ weight_ih.T + bias_ih
    gh = hx @ weight_hh.T + bias_hh
    i_r, i_z, i_n = gi[:, :H], gi[:, H:2 * H], gi[:, 2 * H:]
    h_r, h_z, h_n = gh[:, :H], gh[:, H:2 * H], gh[:, 2 * H:]
    r = jax.nn.sigmoid(i_r + h_r)
    z = jax.nn.sigmoid(i_z + h_z)
    n = jnp.tanh(i_n + r * h_n)
    return (1.0 - z) * n + z * hx


if __name__ == "__main__":
    B, INPUT, HIDDEN, T = 2, 16, 32, 8
    dtype = jnp.float32

    key = jax.random.PRNGKey(0)
    k_wih, k_whh, k_bih, k_bhh, k_x, k_h, k_seq = jax.random.split(key, 7)

    # Deterministic init matching reset_parameters(): U(-stdv, stdv), stdv=1/sqrt(H).
    stdv = 1.0 / math.sqrt(HIDDEN)
    weight_ih = jax.random.uniform(k_wih, (3 * HIDDEN, INPUT), dtype, -stdv, stdv)
    weight_hh = jax.random.uniform(k_whh, (3 * HIDDEN, HIDDEN), dtype, -stdv, stdv)
    bias_ih = jax.random.uniform(k_bih, (3 * HIDDEN,), dtype, -stdv, stdv)
    bias_hh = jax.random.uniform(k_bhh, (3 * HIDDEN,), dtype, -stdv, stdv)

    x = jax.random.normal(k_x, (B, INPUT), dtype)
    hx = jax.random.normal(k_h, (B, HIDDEN), dtype)
    x_seq = jax.random.normal(k_seq, (T, B, INPUT), dtype)

    # Pack once, reuse everywhere (hoisted out of the call path).
    params = prepare_gru_params(weight_ih, weight_hh, bias_ih, bias_hh)

    # --- single step: exact GRUCell.forward semantics ---
    out = jax.block_until_ready(gru_cell(x, hx, params))
    ref = gru_cell_ref(x, hx, weight_ih, weight_hh, bias_ih, bias_hh)
    assert out.shape == (B, HIDDEN)
    assert jnp.allclose(out, ref, atol=1e-5, rtol=1e-5), "single-step mismatch"

    # --- fused T-step recurrence: hoisted GI matmul + one pallas_call (Tb=4) ---
    seq_out = jax.block_until_ready(gru_sequence(x_seq, hx, params, tb=4))

    h = hx
    ref_steps = []
    for t in range(T):
        h = gru_cell_ref(x_seq[t], h, weight_ih, weight_hh, bias_ih, bias_hh)
        ref_steps.append(h)
    ref_seq = jnp.stack(ref_steps)
    assert seq_out.shape == (T, B, HIDDEN)
    assert jnp.allclose(seq_out, ref_seq, atol=1e-4, rtol=1e-4), "sequence mismatch"

    print("KERNEL_OK")
</pallas_src>

<mosaic_0001>
module attributes {stable_mosaic.version = 11 : i64} {
  func.func @gru_seq_kernel(%arg0: i32, %arg1: memref<1x8x384xf32, #tpu.memory_space<vmem>>, %arg2: memref<8x128xf32, #tpu.memory_space<vmem>>, %arg3: memref<128x384xf32, #tpu.memory_space<vmem>>, %arg4: memref<1x384xf32, #tpu.memory_space<vmem>>, %arg5: memref<1x8x128xf32, #tpu.memory_space<vmem>>, %arg6: memref<8x128xf32, #tpu.memory_space<vmem>>) attributes {dimension_semantics = [#tpu.dimension_semantics<arbitrary>], iteration_bounds = array<i64: 1>, scalar_prefetch = 0 : i64, scratch_operands = 1 : i64, tpu.core_type = #tpu.core_type<tc>, window_params = [{transform_indices = @transform_0, window_bounds = array<i64: 1, 8, 384>}, {pipeline_mode = #tpu.pipeline_mode<synchronous>, transform_indices = @transform_1, window_bounds = array<i64: 8, 128>}, {pipeline_mode = #tpu.pipeline_mode<synchronous>, transform_indices = @transform_2, window_bounds = array<i64: 128, 384>}, {pipeline_mode = #tpu.pipeline_mode<synchronous>, transform_indices = @transform_3, window_bounds = array<i64: 1, 384>}, {transform_indices = @transform_4, window_bounds = array<i64: 1, 8, 128>}]} {
    %c0_i32 = arith.constant 0 : i32
    %0 = arith.cmpi eq, %arg0, %c0_i32 : i32
    %1 = arith.extui %0 : i1 to i32
    %c0_i32_0 = arith.constant 0 : i32
    %2 = arith.cmpi ne, %1, %c0_i32_0 : i32
    scf.if %2 {
      %c0_15 = arith.constant 0 : index
      %c0_16 = arith.constant 0 : index
      %41 = vector.load %arg2[%c0_15, %c0_16] : memref<8x128xf32, #tpu.memory_space<vmem>>, vector<8x128xf32>
      %c0_17 = arith.constant 0 : index
      %c0_18 = arith.constant 0 : index
      %42 = vector.load %arg6[%c0_17, %c0_18] : memref<8x128xf32, #tpu.memory_space<vmem>>, vector<8x128xf32>
      tpu.vector_store %arg6[%c0_17, %c0_18], %41 {strides = array<i32>} : memref<8x128xf32, #tpu.memory_space<vmem>>, vector<8x128xf32>,
    } else {
    }
    %c0 = arith.constant 0 : index
    %c0_1 = arith.constant 0 : index
    %3 = vector.load %arg3[%c0, %c0_1] : memref<128x384xf32, #tpu.memory_space<vmem>>, vector<128x384xf32>
    %c0_2 = arith.constant 0 : index
    %c0_3 = arith.constant 0 : index
    %4 = vector.load %arg4[%c0_2, %c0_3] : memref<1x384xf32, #tpu.memory_space<vmem>>, vector<1x384xf32>
    %c0_4 = arith.constant 0 : index
    %c0_5 = arith.constant 0 : index
    %5 = vector.load %arg6[%c0_4, %c0_5] : memref<8x128xf32, #tpu.memory_space<vmem>>, vector<8x128xf32>
    %c0_i32_6 = arith.constant 0 : i32
    %6 = arith.index_cast %c0_i32_6 : i32 to index
    %c0_7 = arith.constant 0 : index
    %c0_8 = arith.constant 0 : index
    %7 = vector.load %arg1[%6, %c0_7, %c0_8] : memref<1x8x384xf32, #tpu.memory_space<vmem>>, vector<1x8x384xf32>
    %8 = vector.shape_cast %7 : vector<1x8x384xf32> to vector<8x384xf32>
    %cst = arith.constant dense<0.000000e+00> : vector<8x384xf32>
    %9 = tpu.matmul %5, %3, %cst {dimension_numbers = #tpu.dot_dimension_numbers<[1], [0], [0], [1], [0, 0, 1, 1], [], []>} : vector<8x128xf32>, vector<128x384xf32>, vector<8x384xf32> -> vector<8x384xf32>
    %10 = vector.broadcast %4 : vector<1x384xf32> to vector<8x384xf32>
    %11 = arith.addf %9, %10 : vector<8x384xf32>
    %12 = vector.extract_strided_slice %8 {offsets = [0, 0], sizes = [8, 128], strides = [1, 1]} : vector<8x384xf32> to vector<8x128xf32>
    %13 = vector.extract_strided_slice %11 {offsets = [0, 0], sizes = [8, 128], strides = [1, 1]} : vector<8x384xf32> to vector<8x128xf32>
    %14 = arith.addf %12, %13 : vector<8x128xf32>
    %15 = arith.negf %14 : vector<8x128xf32>
    %16 = math.exp %15 : vector<8x128xf32>
    %cst_9 = arith.constant 1.000000e+00 : f32
    %17 = vector.broadcast %cst_9 : f32 to vector<8x128xf32>
    %18 = arith.addf %17, %16 : vector<8x128xf32>
    %19 = arith.divf %17, %18 : vector<8x128xf32>
    %20 = vector.extract_strided_slice %8 {offsets = [0, 128], sizes = [8, 128], strides = [1, 1]} : vector<8x384xf32> to vector<8x128xf32>
    %21 = vector.extract_strided_slice %11 {offsets = [0, 128], sizes = [8, 128], strides = [1, 1]} : vector<8x384xf32> to vector<8x128xf32>
    %22 = arith.addf %20, %21 : vector<8x128xf32>
    %23 = arith.negf %22 : vector<8x128xf32>
    %24 = math.exp %23 : vector<8x128xf32>
    %cst_10 = arith.constant 1.000000e+00 : f32
    %25 = vector.broadcast %cst_10 : f32 to vector<8x128xf32>
    %26 = arith.addf %25, %24 : vector<8x128xf32>
    %27 = arith.divf %25, %26 : vector<8x128xf32>
    %28 = vector.extract_strided_slice %8 {offsets = [0, 256], sizes = [8, 128], strides = [1, 1]} : vector<8x384xf32> to vector<8x128xf32>
    %29 = vector.extract_strided_slice %11 {offsets = [0, 256], sizes = [8, 128], strides = [1, 1]} : vector<8x384xf32> to vector<8x128xf32>
    %30 = arith.mulf %19, %29 : vector<8x128xf32>
    %31 = arith.addf %28, %30 : vector<8x128xf32>
    %32 = math.tanh %31 : vector<8x128xf32>
    %33 = arith.subf %5, %32 : vector<8x128xf32>
    %34 = arith.mulf %27, %33 : vector<8x128xf32>
    %35 = arith.addf %32, %34 : vector<8x128xf32>
    %36 = arith.index_cast %c0_i32_6 : i32 to index
    %c0_11 = arith.constant 0 : index
    %c0_12 = arith.constant 0 : index
    %37 = vector.load %arg5[%36, %c0_11, %c0_12] : memref<1x8x128xf32, #tpu.memory_space<vmem>>, vector<1x8x128xf32>
    %38 = vector.shape_cast %37 : vector<1x8x128xf32> to vector<8x128xf32>
    %39 = vector.shape_cast %35 : vector<8x128xf32> to vector<1x8x128xf32>
    tpu.vector_store %arg5[%36, %c0_11, %c0_12], %39 {strides = array<i32>} : memref<1x8x128xf32, #tpu.memory_space<vmem>>, vector<1x8x128xf32>,
    %c1_i32 = arith.constant 1 : i32
    %c0_13 = arith.constant 0 : index
    %c0_14 = arith.constant 0 : index
    %40 = vector.load %arg6[%c0_13, %c0_14] : memref<8x128xf32, #tpu.memory_space<vmem>>, vector<8x128xf32>
    tpu.vector_store %arg6[%c0_13, %c0_14], %35 {strides = array<i32>} : memref<8x128xf32, #tpu.memory_space<vmem>>, vector<8x128xf32>,
    return
  }
  func.func @transform_0(%arg0: i32) -> (i32, i32, i32) {
    %c0_i32 = arith.constant 0 : i32
    %c0_i32_0 = arith.constant 0 : i32
    %c0_i32_1 = arith.constant 0 : i32
    return %arg0, %c0_i32, %c0_i32_0 : i32, i32, i32
  }
  func.func @transform_1(%arg0: i32) -> (i32, i32) {
    %c0_i32 = arith.constant 0 : i32
    %c0_i32_0 = arith.constant 0 : i32
    %c0_i32_1 = arith.constant 0 : i32
    return %c0_i32, %c0_i32_0 : i32, i32
  }
  func.func @transform_2(%arg0: i32) -> (i32, i32) {
    %c0_i32 = arith.constant 0 : i32
    %c0_i32_0 = arith.constant 0 : i32
    %c0_i32_1 = arith.constant 0 : i32
    return %c0_i32, %c0_i32_0 : i32, i32
  }
  func.func @transform_3(%arg0: i32) -> (i32, i32) {
    %c0_i32 = arith.constant 0 : i32
    %c0_i32_0 = arith.constant 0 : i32
    %c0_i32_1 = arith.constant 0 : i32
    return %c0_i32, %c0_i32_0 : i32, i32
  }
  func.func @transform_4(%arg0: i32) -> (i32, i32, i32) {
    %c0_i32 = arith.constant 0 : i32
    %c0_i32_0 = arith.constant 0 : i32
    %c0_i32_1 = arith.constant 0 : i32
    return %arg0, %c0_i32, %c0_i32_0 : i32, i32, i32
  }
}

</mosaic_0001>

<llo_original>
// kernel: tpu_custom_call.1
$region0: #{tpu_custom_call.1}
  #allocation0 [shape = 'u32[]', space=smem, size = 0x4, offset = 0x4, fixed_abs, tag = 'smem constant byte address 0x4 - core index']
  #allocation1 [shape = 'u32[72,128]{1,0:T(1,128)}', space=vmem, size = 0x9000, scoped, tag = 'internal scratch']
  #allocation2 [shape = 'f32[8,128]{1,0:T(8,128)}', space=vmem, size = 0x1000, scoped, tag = 'scratch operand']
  %s0 = inlined_call_operand.hbm [shape: f32[1,8,384], index: 0, kind: input, shape index: {}]
  %s1 = inlined_call_operand.hbm [shape: f32[8,128], index: 1, kind: input, shape index: {}]
  %s2 = inlined_call_operand.hbm [shape: f32[128,384], index: 2, kind: input, shape index: {}]
  %s3 = inlined_call_operand.hbm [shape: f32[1,384], index: 3, kind: input, shape index: {}]
  %s4 = inlined_call_operand.hbm [shape: f32[1,8,128], index: 4, kind: output, shape index: {}]
  %s5 = sld [smem:[#allocation0]]
  $region46: #{tpu_custom_call.1} parent=0
    _
  %s7 = ssub.s32 1, %s5
  %s8 = scalar_select 0, %s7, %s5
  $region1: #{tpu_custom_call.1} parent=0
    #allocation3 [shape = 'u8[12288]{0}', space=vmem, size = 0x3000, scoped, tag = 'input window, operand 0, single buffered']
    #allocation4 [shape = 's32[1]{0}', space=sflag, size = 0x4, scoped, tag = 'scoped memory for tpu_custom_call.1']
    #allocation5 [shape = 's32[1]{0}', space=sflag, size = 0x4, scoped, tag = 'scoped memory for tpu_custom_call.1']
    #allocation6 [shape = 'u8[4096]{0}', space=vmem, size = 0x1000, scoped, tag = 'input window, operand 1, single buffered']
    #allocation7 [shape = 's32[1]{0}', space=sflag, size = 0x4, scoped, tag = 'scoped memory for tpu_custom_call.1']
    #allocation8 [shape = 'u8[196608]{0}', space=vmem, size = 0x30000, scoped, tag = 'input window, operand 2, single buffered']
    #allocation9 [shape = 'u8[1536]{0}', space=vmem, size = 0x800, scoped, tag = 'input window, operand 3, single buffered']
    #allocation10 [shape = 's32[1]{0}', space=sflag, size = 0x4, scoped, tag = 'scoped memory for tpu_custom_call.1']
    #allocation11 [shape = 'u8[4096]{0}', space=vmem, size = 0x1000, scoped, tag = 'output window, operand 0, single buffered']
    %9 = vsyncpa [#allocation4], 0
    %10 = vsyncpa [#allocation7], 0
    %11 = vsyncpa [#allocation10], 0
    %12 = vsyncpa [#allocation5], 0
    // Predicated region
    $region2: #{tpu_custom_call.1} parent=1 // pred_check
      _
    $region3: #{tpu_custom_call.1} parent=1 // pred_check_branch
      %14 = sbr.rel (0) target = $region5
    $region4: #{tpu_custom_call.1} parent=1 // pred_region
      %16 = vsyncadd [#allocation4], 0
      %s18 = sshll.u32 %s0, 4
      %s19 = int_to_ptr.hbm [resolvable:$true] %s18
      %s20 = sshll.u32 [#allocation3], 4
      %s21 = int_to_ptr.vmem [resolvable:$true] %s20
      %23 = dma.hbm_to_vmem [thread:$0]  %s19, 384, %s21, [#allocation4]
    $region5: #{tpu_custom_call.1} parent=1 // pred_fallthru
      _
    // Predicated region
    $region6: #{tpu_custom_call.1} parent=1 // pred_check
      _
    $region7: #{tpu_custom_call.1} parent=1 // pred_check_branch
      %25 = sbr.rel (0) target = $region9
    $region8: #{tpu_custom_call.1} parent=1 // pred_region
      %27 = vsyncadd [#allocation7], 0
      %s29 = sshll.u32 %s1, 4
      %s30 = int_to_ptr.hbm [resolvable:$true] %s29
      %s31 = sshll.u32 [#allocation6], 4
      %s32 = int_to_ptr.vmem [resolvable:$true] %s31
      %34 = dma.hbm_to_vmem [thread:$0]  %s30, 128, %s32, [#allocation7]
    $region9: #{tpu_custom_call.1} parent=1 // pred_fallthru
      _
    // Predicated region
    $region10: #{tpu_custom_call.1} parent=1 // pred_check
      _
    $region11: #{tpu_custom_call.1} parent=1 // pred_check_branch
      %36 = sbr.rel (0) target = $region13
    $region12: #{tpu_custom_call.1} parent=1 // pred_region
      %38 = vsyncadd [#allocation7], 0
      %s39 = sshll.u32 %s2, 4
      %s40 = int_to_ptr.hbm [resolvable:$true] %s39
      %s41 = sshll.u32 [#allocation8], 4
      %s42 = int_to_ptr.vmem [resolvable:$true] %s41
      %47 = dma.hbm_to_vmem [thread:$0]  %s40, 6144, %s42, [#allocation7], 384, 384, 24
    $region13: #{tpu_custom_call.1} parent=1 // pred_fallthru
      _
    // Predicated region
    $region14: #{tpu_custom_call.1} parent=1 // pred_check
      _
    $region15: #{tpu_custom_call.1} parent=1 // pred_check_branch
      %49 = sbr.rel (0) target = $region17
    $region16: #{tpu_custom_call.1} parent=1 // pred_region
      %51 = vsyncadd [#allocation10], 0
      %s53 = sshll.u32 %s3, 4
      %s54 = int_to_ptr.hbm [resolvable:$true] %s53
      %s55 = sshll.u32 [#allocation9], 4
      %s56 = int_to_ptr.vmem [resolvable:$true] %s55
      %58 = dma.hbm_to_vmem [thread:$0]  %s54, 48, %s56, [#allocation10]
    $region17: #{tpu_custom_call.1} parent=1 // pred_fallthru
      _
    // Predicated region
    $region18: #{tpu_custom_call.1} parent=1 // pred_check
      _
    $region19: #{tpu_custom_call.1} parent=1 // pred_check_branch
      %60 = sbr.rel (0) target = $region21
    $region20: #{tpu_custom_call.1} parent=1 // pred_region
      %62 = dma.done [#allocation4], 384
    $region21: #{tpu_custom_call.1} parent=1 // pred_fallthru
      _
    // Predicated region
    $region22: #{tpu_custom_call.1} parent=1 // pred_check
      _
    $region23: #{tpu_custom_call.1} parent=1 // pred_check_branch
      %64 = sbr.rel (0) target = $region25
    $region24: #{tpu_custom_call.1} parent=1 // pred_region
      %66 = dma.done [#allocation7], 128
    $region25: #{tpu_custom_call.1} parent=1 // pred_fallthru
      _
    // Predicated region
    $region26: #{tpu_custom_call.1} parent=1 // pred_check
      _
    $region27: #{tpu_custom_call.1} parent=1 // pred_check_branch
      %68 = sbr.rel (0) target = $region29
    $region28: #{tpu_custom_call.1} parent=1 // pred_region
      %70 = dma.done [#allocation7], 6144
    $region29: #{tpu_custom_call.1} parent=1 // pred_fallthru
      _
    // Predicated region
    $region30: #{tpu_custom_call.1} parent=1 // pred_check
      _
    $region31: #{tpu_custom_call.1} parent=1 // pred_check_branch
      %72 = sbr.rel (0) target = $region33
    $region32: #{tpu_custom_call.1} parent=1 // pred_region
      %74 = dma.done [#allocation10], 48
    $region33: #{tpu_custom_call.1} parent=1 // pred_fallthru
      _
    %p75 = scmp.eq.s32.totalorder 0, 0
    // Predicated region
    $region34: #{tpu_custom_call.1} parent=1 // pred_check
      %p76 = pneg %p75
    $region35: #{tpu_custom_call.1} parent=1 // pred_check_branch
      %78 = sbr.rel (%p76) target = $region37
    $region36: #{tpu_custom_call.1} parent=1 // pred_region
      %v79 = vld [vmem:[#allocation6] sm:$0xff]
      %80 = vst [vmem:[#allocation2] sm:$0xff] %v79
    $region37: #{tpu_custom_call.1} parent=1 // pred_fallthru
      _
    %v81 = vld [vmem:[#allocation8] sm:$0xff]
    %v82 = vld [vmem:[#allocation8 + $0x8] sm:$0xff]
    %v83 = vld [vmem:[#allocation8 + $0x10] sm:$0xff]
    %v84 = vld [vmem:[#allocation8 + $0x18] sm:$0xff]
    %v85 = vld [vmem:[#allocation8 + $0x20] sm:$0xff]
    %v86 = vld [vmem:[#allocation8 + $0x28] sm:$0xff]
    %v87 = vld [vmem:[#allocation8 + $0x30] sm:$0xff]
    %v88 = vld [vmem:[#allocation8 + $0x38] sm:$0xff]
    %v89 = vld [vmem:[#allocation8 + $0x40] sm:$0xff]
    %v90 = vld [vmem:[#allocation8 + $0x48] sm:$0xff]
    %v91 = vld [vmem:[#allocation8 + $0x50] sm:$0xff]
    %v92 = vld [vmem:[#allocation8 + $0x58] sm:$0xff]
    %v93 = vld [vmem:[#allocation8 + $0x60] sm:$0xff]
    %v94 = vld [vmem:[#allocation8 + $0x68] sm:$0xff]
    %v95 = vld [vmem:[#allocation8 + $0x70] sm:$0xff]
    %v96 = vld [vmem:[#allocation8 + $0x78] sm:$0xff]
    %v97 = vld [vmem:[#allocation8 + $0x80] sm:$0xff]
    %v98 = vld [vmem:[#allocation8 + $0x88] sm:$0xff]
    %v99 = vld [vmem:[#allocation8 + $0x90] sm:$0xff]
    %v100 = vld [vmem:[#allocation8 + $0x98] sm:$0xff]
    %v101 = vld [vmem:[#allocation8 + $0xa0] sm:$0xff]
    %v102 = vld [vmem:[#allocation8 + $0xa8] sm:$0xff]
    %v103 = vld [vmem:[#allocation8 + $0xb0] sm:$0xff]
    %v104 = vld [vmem:[#allocation8 + $0xb8] sm:$0xff]
    %v105 = vld [vmem:[#allocation8 + $0xc0] sm:$0xff]
    %v106 = vld [vmem:[#allocation8 + $0xc8] sm:$0xff]
    %v107 = vld [vmem:[#allocation8 + $0xd0] sm:$0xff]
    %v108 = vld [vmem:[#allocation8 + $0xd8] sm:$0xff]
    %v109 = vld [vmem:[#allocation8 + $0xe0] sm:$0xff]
    %v110 = vld [vmem:[#allocation8 + $0xe8] sm:$0xff]
    %v111 = vld [vmem:[#allocation8 + $0xf0] sm:$0xff]
    %v112 = vld [vmem:[#allocation8 + $0xf8] sm:$0xff]
    %v113 = vld [vmem:[#allocation8 + $0x100] sm:$0xff]
    %v114 = vld [vmem:[#allocation8 + $0x108] sm:$0xff]
    %v115 = vld [vmem:[#allocation8 + $0x110] sm:$0xff]
    %v116 = vld [vmem:[#allocation8 + $0x118] sm:$0xff]
    %v117 = vld [vmem:[#allocation8 + $0x120] sm:$0xff]
    %v118 = vld [vmem:[#allocation8 + $0x128] sm:$0xff]
    %v119 = vld [vmem:[#allocation8 + $0x130] sm:$0xff]
    %v120 = vld [vmem:[#allocation8 + $0x138] sm:$0xff]
    %v121 = vld [vmem:[#allocation8 + $0x140] sm:$0xff]
    %v122 = vld [vmem:[#allocation8 + $0x148] sm:$0xff]
    %v123 = vld [vmem:[#allocation8 + $0x150] sm:$0xff]
    %v124 = vld [vmem:[#allocation8 + $0x158] sm:$0xff]
    %v125 = vld [vmem:[#allocation8 + $0x160] sm:$0xff]
    %v126 = vld [vmem:[#allocation8 + $0x168] sm:$0xff]
    %v127 = vld [vmem:[#allocation8 + $0x170] sm:$0xff]
    %v128 = vld [vmem:[#allocation8 + $0x178] sm:$0xff]
    %v129 = vld [vmem:[#allocation9] sm:$0x7]
    %v130 = vld [vmem:[#allocation2] sm:$0xff]
    %v131 = vld [vmem:[#allocation3] sm:$0xff]
    %v132 = vld [vmem:[#allocation3 + $0x8] sm:$0xff]
    %v133 = vld [vmem:[#allocation3 + $0x10] sm:$0xff]
    %v135 = vperm.slane %v129, 0
    %v136 = vperm.slane %v129, 1
    %v137 = vperm.slane %v129, 2
    %141 = vmatpush.msra.mxu0 %v126
    %142 = vmatpush.msra.mxu0 %v123
    %143 = vmatpush.msra.mxu0 %v120
    %144 = vmatpush.msra.mxu0 %v117
    %145 = vmatpush.msra.mxu0 %v114
    %146 = vmatpush.msra.mxu0 %v111
    %147 = vmatpush.msra.mxu0 %v108
    %148 = vmatpush.msra.mxu0 %v105
    %149 = vmatpush.msra.mxu0 %v102
    %150 = vmatpush.msra.mxu0 %v99
    %151 = vmatpush.msra.mxu0 %v96
    %152 = vmatpush.msra.mxu0 %v93
    %153 = vmatpush.msra.mxu0 %v90
    %154 = vmatpush.msra.mxu0 %v87
    %155 = vmatpush.msra.mxu0 %v84
    %156 = vmatpush.msra.mxu0 %v81
    %157 = vmatmul.f32.gmra.mxu0 %v130
    %v158 = vpop.f32.mrf.mxu0
    %v159 = vadd.f32 %v135, %v158
    %160 = vdwg.mxu0
    %161 = vmatpush.msra.mxu0 %v127
    %162 = vmatpush.msra.mxu0 %v124
    %163 = vmatpush.msra.mxu0 %v121
    %164 = vmatpush.msra.mxu0 %v118
    %165 = vmatpush.msra.mxu0 %v115
    %166 = vmatpush.msra.mxu0 %v112
    %167 = vmatpush.msra.mxu0 %v109
    %168 = vmatpush.msra.mxu0 %v106
    %169 = vmatpush.msra.mxu0 %v103
    %170 = vmatpush.msra.mxu0 %v100
    %171 = vmatpush.msra.mxu0 %v97
    %172 = vmatpush.msra.mxu0 %v94
    %173 = vmatpush.msra.mxu0 %v91
    %174 = vmatpush.msra.mxu0 %v88
    %175 = vmatpush.msra.mxu0 %v85
    %176 = vmatpush.msra.mxu0 %v82
    %177 = vmatmul.f32.gmra.mxu0 %v130
    %v178 = vpop.f32.mrf.mxu0
    %v179 = vadd.f32 %v136, %v178
    %180 = vdwg.mxu0
    %181 = vmatpush.msra.mxu0 %v128
    %182 = vmatpush.msra.mxu0 %v125
    %183 = vmatpush.msra.mxu0 %v122
    %184 = vmatpush.msra.mxu0 %v119
    %185 = vmatpush.msra.mxu0 %v116
    %186 = vmatpush.msra.mxu0 %v113
    %187 = vmatpush.msra.mxu0 %v110
    %188 = vmatpush.msra.mxu0 %v107
    %189 = vmatpush.msra.mxu0 %v104
    %190 = vmatpush.msra.mxu0 %v101
    %191 = vmatpush.msra.mxu0 %v98
    %192 = vmatpush.msra.mxu0 %v95
    %193 = vmatpush.msra.mxu0 %v92
    %194 = vmatpush.msra.mxu0 %v89
    %195 = vmatpush.msra.mxu0 %v86
    %196 = vmatpush.msra.mxu0 %v83
    %197 = vmatmul.f32.gmra.mxu0 %v130
    %v198 = vpop.f32.mrf.mxu0
    %v199 = vadd.f32 %v137, %v198
    %200 = vdwg.mxu0
    %v201 = vadd.f32 %v131, %v159
    %v202 = vxor.u32 %v201, 2147483648
    %v203 = vmul.f32 %v202, 1.442695
    %v204 = vpow.pop %v203
    %v205 = vadd.f32 %v204, 1.0
    %v206 = vrcp.pop %v205
    %v207 = vmul.f32 %v205, %v206
    %v208 = vsub.f32 1.0, %v207
    %v209 = vmul.f32 %v206, %v208
    %v210 = vadd.f32 %v206, %v209
    %vm211 = vweird.f32 %v205
    %vm212 = vweird.f32 %v206
    %vm213 = vmor %vm211, %vm212
    %v214 = vsel %vm213, %v206, %v210
    %v215 = vand.u32 2147483647, %v205
    %vm216 = vcmp.eq.f32.partialorder %v215, 8.507059e+37
    %v217 = vand.u32 %v205, 2147483648
    %v218 = vor.u32 1.1754944e-38, %v217
    %v219 = vsel %vm216, %v218, %v214
    %v220 = vmul.f32 1.0, %v219
    %v221 = vadd.f32 %v132, %v179
    %v222 = vxor.u32 %v221, 2147483648
    %v223 = vmul.f32 %v222, 1.442695
    %v224 = vpow.pop %v223
    %v225 = vadd.f32 %v224, 1.0
    %v226 = vrcp.pop %v225
    %v227 = vmul.f32 %v225, %v226
    %v228 = vsub.f32 1.0, %v227
    %v229 = vmul.f32 %v226, %v228
    %v230 = vadd.f32 %v226, %v229
    %vm231 = vweird.f32 %v225
    %vm232 = vweird.f32 %v226
    %vm233 = vmor %vm231, %vm232
    %v234 = vsel %vm233, %v226, %v230
    %v235 = vand.u32 2147483647, %v225
    %vm236 = vcmp.eq.f32.partialorder %v235, 8.507059e+37
    %v237 = vand.u32 %v225, 2147483648
    %v238 = vor.u32 1.1754944e-38, %v237
    %v239 = vsel %vm236, %v238, %v234
    %v240 = vmul.f32 1.0, %v239
    %v241 = vmul.f32 %v220, %v199
    %v242 = vadd.f32 %v133, %v241
    %v243 = vtanh.pop %v242
    %v244 = vsub.f32 %v130, %v243
    %v245 = vmul.f32 %v240, %v244
    %v246 = vadd.f32 %v243, %v245
    %247 = vst [vmem:[#allocation11] sm:$0xff] %v246
    %248 = vst [vmem:[#allocation2] sm:$0xff] %v246
    // Predicated region
    $region38: #{tpu_custom_call.1} parent=1 // pred_check
      _
    $region39: #{tpu_custom_call.1} parent=1 // pred_check_branch
      %250 = sbr.rel (0) target = $region41
    $region40: #{tpu_custom_call.1} parent=1 // pred_region
      %252 = vsyncadd [#allocation5], 0
      %s254 = sshll.u32 [#allocation11], 4
      %s255 = int_to_ptr.vmem [resolvable:$true] %s254
      %s256 = sshll.u32 %s4, 4
      %s257 = int_to_ptr.hbm [resolvable:$true] %s256
      %259 = dma.vmem_to_hbm [thread:$0]  %s255, 128, %s257, [#allocation5]
    $region41: #{tpu_custom_call.1} parent=1 // pred_fallthru
      _
    // Predicated region
    $region42: #{tpu_custom_call.1} parent=1 // pred_check
      _
    $region43: #{tpu_custom_call.1} parent=1 // pred_check_branch
      %261 = sbr.rel (0) target = $region45
    $region44: #{tpu_custom_call.1} parent=1 // pred_region
      %263 = dma.done [#allocation5], 128
    $region45: #{tpu_custom_call.1} parent=1 // pred_fallthru
      _
    %264 = vsyncpa [#allocation4], 1
    %265 = vsyncpa [#allocation7], 1
    %266 = vsyncpa [#allocation10], 1
    %267 = vsyncpa [#allocation5], 1

</llo_original>
